<compile_context>
chip_gen: v7x
topology: tpu7x:2x2x1
jax: 0.10.0
libtpu: 0.0.40
codegen_flags: <defaults>
</compile_context>

<pallas_src>
import jax
import jax.numpy as jnp
from jax.experimental import pallas as pl
from jax.experimental.pallas import tpu as pltpu

_TARGET_STEP_BYTES = 4 * 1024 * 1024   # ~4 MiB of HBM traffic per grid step
_MAX_BB = 16                           # unroll cap for the per-batch loop
_VMEM_LIMIT_BYTES = 32 * 1024 * 1024   # explicit scoped-VMEM budget (all gens)

# Lazily resolved: can this Mosaic build lower the minor-dim-collapsing
# reshape used for the lane-dense output?  (Decided on first eager call.)
_FLATTEN_OK = None


def _choose_tiles(B, C, T, c_out):
    """Pick (Bb, Tt) so one grid step moves ~_TARGET_STEP_BYTES of HBM traffic."""
    bytes_per_token = 4 * (C + c_out)                 # f32 read + f32 write
    tok_budget = max(128, _TARGET_STEP_BYTES // bytes_per_token)
    if T <= tok_budget:
        # Whole T fits in one step: batch several batch elements per step.
        Tt = T
        Bb = max(1, min(B, _MAX_BB, tok_budget // max(T, 1)))
    else:
        # Tile T; multiple of 128 keeps the lane axis aligned for partial grids.
        Tt = min(T, max(128, (tok_budget // 128) * 128))
        Bb = 1
    # v7x has two TensorCores per chip: keep >= 2 grid steps whenever B > 1 so
    # neither core sits idle.
    if B > 1 and pl.cdiv(B, Bb) * pl.cdiv(T, Tt) < 2:
        Bb = max(1, (B + 1) // 2)
    return Bb, Tt


def _make_kernel(Bb, Tt, c_out, flatten):
    def kernel(x_ref, w_ref, b_ref, o_ref):
        # x_ref: (Bb, C, Tt)  res_with_dim tile in native (B, C, T) layout
        # w_ref: (c_out, C)   full nn.Linear weight, resident across the grid
        # b_ref: (1, c_out)   bias row
        # o_ref: (Bb, 1, Tt*c_out) if flatten else (Bb, Tt, c_out)
        w = w_ref[...]
        bias = b_ref[...]
        for b in range(Bb):                       # static unroll, Bb <= _MAX_BB
            xb = x_ref[b]                                          # (C, Tt)
            zb = jnp.dot(w, xb, preferred_element_type=jnp.float32)  # (c_out, Tt)
            yb = jnp.transpose(zb) + bias                          # (Tt, c_out)
            if flatten:
                # Collapse to a 128-multiple lane axis -> unmasked, contiguous
                # stores and a dense VMEM->HBM writeback.
                o_ref[b, 0] = yb.reshape(Tt * c_out)
            else:
                o_ref[b] = yb
    return kernel


def _weak_decoder_call(params, res_with_dim, flatten):
    B, C, T = res_with_dim.shape
    W = params["W"]          # (c_out, C) -- nn.Linear layout, no transpose
    b2d = params["b2d"]      # (1, c_out)
    c_out = W.shape[0]

    Bb, Tt = _choose_tiles(B, C, T, c_out)
    grid = (pl.cdiv(B, Bb), pl.cdiv(T, Tt))

    cost = pl.CostEstimate(
        flops=2 * B * T * C * c_out,
        transcendentals=0,
        bytes_accessed=4 * (B * C * T + c_out * C + c_out + B * T * c_out),
    )
    cparams = pltpu.CompilerParams(
        dimension_semantics=("parallel", "parallel"),
        vmem_limit_bytes=_VMEM_LIMIT_BYTES,
    )
    in_specs = [
        pl.BlockSpec((Bb, C, Tt), lambda bi, ti: (bi, 0, ti)),   # activation tile
        pl.BlockSpec((c_out, C), lambda bi, ti: (0, 0)),         # resident weight
        pl.BlockSpec((1, c_out), lambda bi, ti: (0, 0)),         # bias row
    ]
    kernel = _make_kernel(Bb, Tt, c_out, flatten)

    if flatten:
        out = pl.pallas_call(
            kernel,
            out_shape=jax.ShapeDtypeStruct((B, 1, T * c_out), jnp.float32),
            grid_spec=pltpu.PrefetchScalarGridSpec(
                num_scalar_prefetch=0,
                grid=grid,
                in_specs=in_specs,
                out_specs=pl.BlockSpec(
                    (Bb, 1, Tt * c_out), lambda bi, ti: (bi, 0, ti)),
            ),
            compiler_params=cparams,
            cost_estimate=cost,
        )(res_with_dim, W, b2d)
        # Free reshape: (B, 1, T*c_out) and (B, T, c_out) share row-major layout.
        return out.reshape(B, T, c_out)

    return pl.pallas_call(
        kernel,
        out_shape=jax.ShapeDtypeStruct((B, T, c_out), jnp.float32),
        grid_spec=pltpu.PrefetchScalarGridSpec(
            num_scalar_prefetch=0,
            grid=grid,
            in_specs=in_specs,
            out_specs=pl.BlockSpec((Bb, Tt, c_out), lambda bi, ti: (bi, ti, 0)),
        ),
        compiler_params=cparams,
        cost_estimate=cost,
    )(res_with_dim, W, b2d)


def weak_decoder_apply(params, res_with_dim):
    """Fused `Decoder.out_linear(res_with_dim.permute(0, 2, 1))`.

    res_with_dim: (B, C=d_model, T) f32  ->  out: (B, T, c_out) f32
    Matches PyTorch nn.Linear (y = x @ W^T + b) exactly (f32 accumulation).

    Tries the lane-dense flattened-output layout first; if the Mosaic build
    cannot lower that relayout, falls back (cached) to the masked-store layout.
    Call eagerly once before wrapping in jax.jit so the choice is resolved.
    """
    global _FLATTEN_OK
    if _FLATTEN_OK is None:
        try:
            out = _weak_decoder_call(params, res_with_dim, flatten=True)
            jax.block_until_ready(out)
            _FLATTEN_OK = True
            return out
        except Exception:  # unsupported minor-dim-collapsing reshape on this build
            _FLATTEN_OK = False
    return _weak_decoder_call(params, res_with_dim, flatten=_FLATTEN_OK)


def init_decoder_params(key, d_model, c_out):
    # Deterministic synthetic init mirroring PyTorch nn.Linear default:
    # U(-1/sqrt(fan_in), 1/sqrt(fan_in)) for both weight and bias.
    k1, k2 = jax.random.split(key)
    bound = 1.0 / float(d_model) ** 0.5
    W = jax.random.uniform(k1, (c_out, d_model), jnp.float32, -bound, bound)
    b = jax.random.uniform(k2, (c_out,), jnp.float32, -bound, bound)
    # (1, c_out) bias row hoisted to init (kept out of the forward path).
    return {"W": W, "b": b, "b2d": b.reshape(1, c_out)}


def transformer_var_forward(params, res_with_dim, adj=None, memory_adj=None, attn=None):
    """Pallas port of TransformerVar.forward's decoder path.

    res_with_dim: (B, output_c, T) -- enc_outputs['res_with_dim'] from GraphBlock.
    The kernel consumes it in this native layout and internally applies the
    permute(0, 2, 1) + out_linear of the reference, returning (B, T, c_out).

    # TODO(synk): InputEmbedding and GraphBlock (encoder2) definitions were not
    # provided in the reference source, so their compute cannot be translated;
    # this wrapper consumes the encoder output (res_with_dim) and passes the
    # encoder side-outputs (adj / memory_adj / attn) straight through.
    """
    out = weak_decoder_apply(params, res_with_dim)
    return {"out": out, "memory_adj": memory_adj, "adj": adj, "attn": attn}


if __name__ == "__main__":
    # Small shapes consistent with the module: enc_in == output_c == c_out.
    B, T, output_c = 2, 16, 32

    key = jax.random.PRNGKey(0)
    kp, kx = jax.random.split(key)

    params = init_decoder_params(kp, d_model=output_c, c_out=output_c)

    # Synthetic encoder output `res_with_dim` : (B, output_c, T), consumed by
    # the weak decoder exactly as `self.weak_decoder(out.permute(0, 2, 1))`.
    res_with_dim = jax.random.normal(kx, (B, output_c, T), jnp.float32)

    outs = transformer_var_forward(params, res_with_dim)
    out = jax.block_until_ready(outs["out"])

    # Plain-JAX reference for the decoder linear (permute + nn.Linear).
    x_ref = jnp.transpose(res_with_dim, (0, 2, 1))            # (B, T, output_c)
    ref = jnp.einsum("blc,oc->blo", x_ref, params["W"]) + params["b"]

    assert out.shape == (B, T, output_c), out.shape
    assert out.dtype == jnp.float32
    assert jnp.allclose(out, ref, atol=1e-5, rtol=1e-5), float(
        jnp.max(jnp.abs(out - ref))
    )
    print("KERNEL_OK")
</pallas_src>

<mosaic_0001>
module attributes {stable_mosaic.version = 11 : i64} {
  func.func @kernel(%arg0: i32, %arg1: i32, %arg2: memref<1x32x16xf32, #tpu.memory_space<vmem>>, %arg3: memref<32x32xf32, #tpu.memory_space<vmem>>, %arg4: memref<1x32xf32, #tpu.memory_space<vmem>>, %arg5: memref<1x1x512xf32, #tpu.memory_space<vmem>>) attributes {dimension_semantics = [#tpu.dimension_semantics<parallel>, #tpu.dimension_semantics<parallel>], iteration_bounds = array<i64: 2, 1>, scalar_prefetch = 0 : i64, scratch_operands = 0 : i64, tpu.core_type = #tpu.core_type<tc>, window_params = [{transform_indices = @transform_0, window_bounds = array<i64: 1, 32, 16>}, {pipeline_mode = #tpu.pipeline_mode<synchronous>, transform_indices = @transform_1, window_bounds = array<i64: 32, 32>}, {pipeline_mode = #tpu.pipeline_mode<synchronous>, transform_indices = @transform_2, window_bounds = array<i64: 1, 32>}, {transform_indices = @transform_3, window_bounds = array<i64: 1, 1, 512>}]} {
    %c0 = arith.constant 0 : index
    %c0_0 = arith.constant 0 : index
    %0 = vector.load %arg3[%c0, %c0_0] : memref<32x32xf32, #tpu.memory_space<vmem>>, vector<32x32xf32>
    %c0_1 = arith.constant 0 : index
    %c0_2 = arith.constant 0 : index
    %1 = vector.load %arg4[%c0_1, %c0_2] : memref<1x32xf32, #tpu.memory_space<vmem>>, vector<1x32xf32>
    %c0_3 = arith.constant 0 : index
    %c0_4 = arith.constant 0 : index
    %c0_5 = arith.constant 0 : index
    %2 = vector.load %arg2[%c0_3, %c0_4, %c0_5] : memref<1x32x16xf32, #tpu.memory_space<vmem>>, vector<1x32x16xf32>
    %3 = vector.shape_cast %2 : vector<1x32x16xf32> to vector<32x16xf32>
    %cst = arith.constant dense<0.000000e+00> : vector<32x16xf32>
    %4 = tpu.matmul %0, %3, %cst {dimension_numbers = #tpu.dot_dimension_numbers<[1], [0], [0], [1], [0, 0, 1, 1], [], []>} : vector<32x32xf32>, vector<32x16xf32>, vector<32x16xf32> -> vector<32x16xf32>
    %5 = tpu.transpose %4, [1, 0] : vector<32x16xf32> -> vector<16x32xf32>
    %6 = vector.broadcast %1 : vector<1x32xf32> to vector<16x32xf32>
    %7 = arith.addf %5, %6 : vector<16x32xf32>
    %8 = vector.shape_cast %7 : vector<16x32xf32> to vector<512xf32>
    %c0_6 = arith.constant 0 : index
    %c0_7 = arith.constant 0 : index
    %c0_8 = arith.constant 0 : index
    %9 = vector.load %arg5[%c0_6, %c0_7, %c0_8] : memref<1x1x512xf32, #tpu.memory_space<vmem>>, vector<1x1x512xf32>
    %10 = vector.shape_cast %9 : vector<1x1x512xf32> to vector<512xf32>
    %11 = vector.shape_cast %8 : vector<512xf32> to vector<1x1x512xf32>
    tpu.vector_store %arg5[%c0_6, %c0_7, %c0_8], %11 {strides = array<i32>} : memref<1x1x512xf32, #tpu.memory_space<vmem>>, vector<1x1x512xf32>,
    return
  }
  func.func @transform_0(%arg0: i32, %arg1: i32) -> (i32, i32, i32) {
    %c0_i32 = arith.constant 0 : i32
    %c0_i32_0 = arith.constant 0 : i32
    return %arg0, %c0_i32, %arg1 : i32, i32, i32
  }
  func.func @transform_1(%arg0: i32, %arg1: i32) -> (i32, i32) {
    %c0_i32 = arith.constant 0 : i32
    %c0_i32_0 = arith.constant 0 : i32
    %c0_i32_1 = arith.constant 0 : i32
    return %c0_i32, %c0_i32_0 : i32, i32
  }
  func.func @transform_2(%arg0: i32, %arg1: i32) -> (i32, i32) {
    %c0_i32 = arith.constant 0 : i32
    %c0_i32_0 = arith.constant 0 : i32
    %c0_i32_1 = arith.constant 0 : i32
    return %c0_i32, %c0_i32_0 : i32, i32
  }
  func.func @transform_3(%arg0: i32, %arg1: i32) -> (i32, i32, i32) {
    %c0_i32 = arith.constant 0 : i32
    %c0_i32_0 = arith.constant 0 : i32
    return %arg0, %c0_i32, %arg1 : i32, i32, i32
  }
}

module attributes {stable_mosaic.version = 11 : i64} {
  func.func @kernel(%arg0: i32, %arg1: i32, %arg2: memref<1x32x16xf32, #tpu.memory_space<vmem>>, %arg3: memref<32x32xf32, #tpu.memory_space<vmem>>, %arg4: memref<1x32xf32, #tpu.memory_space<vmem>>, %arg5: memref<1x16x32xf32, #tpu.memory_space<vmem>>) attributes {dimension_semantics = [#tpu.dimension_semantics<parallel>, #tpu.dimension_semantics<parallel>], iteration_bounds = array<i64: 2, 1>, scalar_prefetch = 0 : i64, scratch_operands = 0 : i64, tpu.core_type = #tpu.core_type<tc>, window_params = [{transform_indices = @transform_0, window_bounds = array<i64: 1, 32, 16>}, {pipeline_mode = #tpu.pipeline_mode<synchronous>, transform_indices = @transform_1, window_bounds = array<i64: 32, 32>}, {pipeline_mode = #tpu.pipeline_mode<synchronous>, transform_indices = @transform_2, window_bounds = array<i64: 1, 32>}, {transform_indices = @transform_3, window_bounds = array<i64: 1, 16, 32>}]} {
    %c0 = arith.constant 0 : index
    %c0_0 = arith.constant 0 : index
    %0 = vector.load %arg3[%c0, %c0_0] : memref<32x32xf32, #tpu.memory_space<vmem>>, vector<32x32xf32>
    %c0_1 = arith.constant 0 : index
    %c0_2 = arith.constant 0 : index
    %1 = vector.load %arg4[%c0_1, %c0_2] : memref<1x32xf32, #tpu.memory_space<vmem>>, vector<1x32xf32>
    %c0_3 = arith.constant 0 : index
    %c0_4 = arith.constant 0 : index
    %c0_5 = arith.constant 0 : index
    %2 = vector.load %arg2[%c0_3, %c0_4, %c0_5] : memref<1x32x16xf32, #tpu.memory_space<vmem>>, vector<1x32x16xf32>
    %3 = vector.shape_cast %2 : vector<1x32x16xf32> to vector<32x16xf32>
    %cst = arith.constant dense<0.000000e+00> : vector<32x16xf32>
    %4 = tpu.matmul %0, %3, %cst {dimension_numbers = #tpu.dot_dimension_numbers<[1], [0], [0], [1], [0, 0, 1, 1], [], []>} : vector<32x32xf32>, vector<32x16xf32>, vector<32x16xf32> -> vector<32x16xf32>
    %5 = tpu.transpose %4, [1, 0] : vector<32x16xf32> -> vector<16x32xf32>
    %6 = vector.broadcast %1 : vector<1x32xf32> to vector<16x32xf32>
    %7 = arith.addf %5, %6 : vector<16x32xf32>
    %c0_6 = arith.constant 0 : index
    %c0_7 = arith.constant 0 : index
    %c0_8 = arith.constant 0 : index
    %8 = vector.load %arg5[%c0_6, %c0_7, %c0_8] : memref<1x16x32xf32, #tpu.memory_space<vmem>>, vector<1x16x32xf32>
    %9 = vector.shape_cast %8 : vector<1x16x32xf32> to vector<16x32xf32>
    %10 = vector.shape_cast %7 : vector<16x32xf32> to vector<1x16x32xf32>
    tpu.vector_store %arg5[%c0_6, %c0_7, %c0_8], %10 {strides = array<i32>} : memref<1x16x32xf32, #tpu.memory_space<vmem>>, vector<1x16x32xf32>,
    return
  }
  func.func @transform_0(%arg0: i32, %arg1: i32) -> (i32, i32, i32) {
    %c0_i32 = arith.constant 0 : i32
    %c0_i32_0 = arith.constant 0 : i32
    return %arg0, %c0_i32, %arg1 : i32, i32, i32
  }
  func.func @transform_1(%arg0: i32, %arg1: i32) -> (i32, i32) {
    %c0_i32 = arith.constant 0 : i32
    %c0_i32_0 = arith.constant 0 : i32
    %c0_i32_1 = arith.constant 0 : i32
    return %c0_i32, %c0_i32_0 : i32, i32
  }
  func.func @transform_2(%arg0: i32, %arg1: i32) -> (i32, i32) {
    %c0_i32 = arith.constant 0 : i32
    %c0_i32_0 = arith.constant 0 : i32
    %c0_i32_1 = arith.constant 0 : i32
    return %c0_i32, %c0_i32_0 : i32, i32
  }
  func.func @transform_3(%arg0: i32, %arg1: i32) -> (i32, i32, i32) {
    %c0_i32 = arith.constant 0 : i32
    %c0_i32_0 = arith.constant 0 : i32
    return %arg0, %arg1, %c0_i32 : i32, i32, i32
  }
}

</mosaic_0001>

<llo_original>
// kernel: tpu_custom_call.1
$region0: #{tpu_custom_call.1}
  #allocation0 [shape = 'u32[]', space=smem, size = 0x4, offset = 0x4, fixed_abs, tag = 'smem constant byte address 0x4 - core index']
  #allocation1 [shape = 'u32[144,128]{1,0:T(1,128)}', space=vmem, size = 0x12000, scoped, tag = 'internal scratch']
  %s0 = inlined_call_operand.vmem [shape: f32[2,32,16], index: 0, kind: input, shape index: {}]
  %s1 = inlined_call_operand.vmem [shape: f32[32,32], index: 1, kind: input, shape index: {}]
  %s2 = inlined_call_operand.vmem [shape: f32[1,32], index: 2, kind: input, shape index: {}]
  %s3 = inlined_call_operand.hbm [shape: f32[2,16,32], index: 3, kind: output, shape index: {}]
  %s4 = sld [smem:[#allocation0]]
  $region45: #{tpu_custom_call.1} parent=0
    _
  %s6 = ssub.s32 1, %s4
  %s7 = scalar_select 0, %s6, %s4
  $region1: #{tpu_custom_call.1} parent=0
    #allocation2 [shape = 'u8[16384]{0}', space=vmem, size = 0x4000, scoped, tag = 'output window, operand 0']
    #allocation3 [shape = 's32[2]{0}', space=sflag, size = 0x8, scoped, tag = 'scoped memory for tpu_custom_call.1']
    %8 = vsyncpa [#allocation3], 0
    %s9 = scalar_lea.sflag [#allocation3], 1
    %10 = vsyncpa %s9, 0
    loop: start=0, step=1, limit=4
    $region2: #{tpu_custom_call.1} parent=1 // loop_pre_header
      _
    $region3: #{tpu_custom_call.1} parent=1 // loop_header
      %s12 = sphi 0, %s16
      %p13 = scmp.ge.s32.totalorder %s12, 4
      %s19 = sphi 0, %s31
      %s20 = sphi 0, %s27
      %s21 = sphi 0, %s19
      %s22 = sphi 0, %s20
      %s23 = sphi 0, %s21
      %s24 = sphi 0, %s22
      %s36 = sphi 0, %s38
      %s39 = sphi 0, %s36
      %s40 = sphi 0, %s39
      %s56 = sphi 0, %s40
      %s60 = sphi 0, %s60
      %s62 = sphi 0, %s60
      %s63 = sphi 0, %s62
      %s77 = sphi 0, %s63
      %s81 = sphi 0, %s81
      %s83 = sphi 0, %s81
      %s84 = sphi 0, %s83
      %s98 = sphi 0, %s84
      %s106 = sphi 0, %s108
      %s109 = sphi 0, %s106
      %s110 = sphi 0, %s109
      %s126 = sphi 0, %s110
    $region4: #{tpu_custom_call.1} parent=1 // loop_header_branch
      %15 = sbr.rel (%p13) target = $region8
    $region5: #{tpu_custom_call.1} parent=1 // loop_body
      %s17 = ssub.s32 %s12, 1
      %s18 = ssub.s32 %s12, 2
      %s25 = sadd.s32 1, %s20
      %p26 = scmp.ge.s32.totalorder %s25, 1
      %s27 = scalar_select %p26, 0, %s25
      %s28 = sadd.s32 1, %s19
      %s29 = scalar_select %p26, %s28, %s19
      %p30 = scmp.ge.s32.totalorder %s29, 2
      %s31 = scalar_select %p30, 0, %s29
      %s32 = ssub.s32 %s19, %s31
      %s33 = ssub.s32 %s20, %s27
      %s34 = sor.u32 %s32, %s33
      %p35 = scmp.eq.s32.totalorder %s34, 0
      %s37 = sadd.s32 %s36, 1
      %s38 = scalar_select %p35, %s36, %s37
      %p41 = pneg %p35
      %p42 = scmp.eq.s32.totalorder %s12, 1
      %p43 = por %p41, %p42
      %p44 = scmp.ne.s32.totalorder %s36, %s39
      %p45 = scmp.eq.s32.totalorder %s12, 0
      %p46 = por %p44, %p45
      %p47 = scmp.ne.s32.totalorder %s36, %s39
      %p48 = scmp.eq.s32.totalorder %s17, 1
      %p49 = por %p47, %p48
      %p50 = scmp.ne.s32.totalorder %s39, %s40
      %p51 = scmp.eq.s32.totalorder %s17, 0
      %p52 = por %p50, %p51
      %p53 = scmp.ne.s32.totalorder %s39, %s40
      %p54 = scmp.eq.s32.totalorder %s18, 1
      %p55 = por %p53, %p54
      %p57 = scmp.ne.s32.totalorder %s40, %s56
      %p58 = scmp.eq.s32.totalorder %s18, 0
      %p59 = por %p57, %p58
      %s61 = sadd.s32 %s60, 1
      %p64 = scmp.eq.s32.totalorder %s12, 1
      %p65 = scmp.ne.s32.totalorder %s60, %s62
      %p66 = scmp.eq.s32.totalorder %s12, 0
      %p67 = por %p65, %p66
      %p68 = scmp.ne.s32.totalorder %s60, %s62
      %p69 = scmp.eq.s32.totalorder %s17, 1
      %p70 = por %p68, %p69
      %p71 = scmp.ne.s32.totalorder %s62, %s63
      %p72 = scmp.eq.s32.totalorder %s17, 0
      %p73 = por %p71, %p72
      %p74 = scmp.ne.s32.totalorder %s62, %s63
      %p75 = scmp.eq.s32.totalorder %s18, 1
      %p76 = por %p74, %p75
      %p78 = scmp.ne.s32.totalorder %s63, %s77
      %p79 = scmp.eq.s32.totalorder %s18, 0
      %p80 = por %p78, %p79
      %s82 = sadd.s32 %s81, 1
      %p85 = scmp.eq.s32.totalorder %s12, 1
      %p86 = scmp.ne.s32.totalorder %s81, %s83
      %p87 = scmp.eq.s32.totalorder %s12, 0
      %p88 = por %p86, %p87
      %p89 = scmp.ne.s32.totalorder %s81, %s83
      %p90 = scmp.eq.s32.totalorder %s17, 1
      %p91 = por %p89, %p90
      %p92 = scmp.ne.s32.totalorder %s83, %s84
      %p93 = scmp.eq.s32.totalorder %s17, 0
      %p94 = por %p92, %p93
      %p95 = scmp.ne.s32.totalorder %s83, %s84
      %p96 = scmp.eq.s32.totalorder %s18, 1
      %p97 = por %p95, %p96
      %p99 = scmp.ne.s32.totalorder %s84, %s98
      %p100 = scmp.eq.s32.totalorder %s18, 0
      %p101 = por %p99, %p100
      %s102 = ssub.s32 %s19, %s31
      %s103 = ssub.s32 %s20, %s27
      %s104 = sor.u32 %s102, %s103
      %p105 = scmp.eq.s32.totalorder %s104, 0
      %s107 = sadd.s32 %s106, 1
      %s108 = scalar_select %p105, %s106, %s107
      %p111 = pneg %p105
      %p112 = scmp.eq.s32.totalorder %s12, 1
      %p113 = por %p111, %p112
      %p114 = scmp.ne.s32.totalorder %s106, %s109
      %p115 = scmp.eq.s32.totalorder %s12, 0
      %p116 = por %p114, %p115
      %p117 = scmp.ne.s32.totalorder %s106, %s109
      %p118 = scmp.eq.s32.totalorder %s17, 1
      %p119 = por %p117, %p118
      %p120 = scmp.ne.s32.totalorder %s109, %s110
      %p121 = scmp.eq.s32.totalorder %s17, 0
      %p122 = por %p120, %p121
      %p123 = scmp.ne.s32.totalorder %s109, %s110
      %p124 = scmp.eq.s32.totalorder %s18, 1
      %p125 = por %p123, %p124
      %p127 = scmp.ne.s32.totalorder %s110, %s126
      %p128 = scmp.eq.s32.totalorder %s18, 0
      %p129 = por %p127, %p128
      %p130 = scmp.le.s32.totalorder 1, %s12
      %p131 = scmp.lt.s32.totalorder %s12, 3
      %p132 = pnand %p130, %p131
      %p133 = pneg %p132
      // Predicated region
      $region9: #{tpu_custom_call.1} parent=5 // pred_check
        _
      $region10: #{tpu_custom_call.1} parent=5 // pred_check_branch
        %135 = sbr.rel (%p132) target = $region12
      $region11: #{tpu_custom_call.1} parent=5 // pred_region
        %s136 = ssub.s32 %s12, 1
        // Predicated region
        $region13: #{tpu_custom_call.1} parent=11 // pred_check
          %p137 = pneg %p73
        $region14: #{tpu_custom_call.1} parent=11 // pred_check_branch
          %139 = sbr.rel (%p137) target = $region16
        $region15: #{tpu_custom_call.1} parent=11 // pred_region
          _
        $region16: #{tpu_custom_call.1} parent=11 // pred_fallthru
          _
        // Predicated region
        $region17: #{tpu_custom_call.1} parent=11 // pred_check
          %p140 = pneg %p94
        $region18: #{tpu_custom_call.1} parent=11 // pred_check_branch
          %142 = sbr.rel (%p140) target = $region20
        $region19: #{tpu_custom_call.1} parent=11 // pred_region
          _
        $region20: #{tpu_custom_call.1} parent=11 // pred_fallthru
          _
      $region12: #{tpu_custom_call.1} parent=5 // pred_fallthru
        _
      %p143 = scmp.lt.s32.totalorder %s12, 2
      // Predicated region
      $region21: #{tpu_custom_call.1} parent=5 // pred_check
        %p144 = pneg %p143
      $region22: #{tpu_custom_call.1} parent=5 // pred_check_branch
        %146 = sbr.rel (%p144) target = $region24
      $region23: #{tpu_custom_call.1} parent=5 // pred_region
        // Predicated region
        $region25: #{tpu_custom_call.1} parent=23 // pred_check
          %p147 = pneg %p46
        $region26: #{tpu_custom_call.1} parent=23 // pred_check_branch
          %149 = sbr.rel (%p147) target = $region28
        $region27: #{tpu_custom_call.1} parent=23 // pred_region
          %p150 = scmp.lt.s32.totalorder %s19, 1
          %s151 = scalar_select %p150, %s19, 1
          %p152 = scmp.lt.s32.totalorder %s20, 0
          %s153 = scalar_select %p152, %s20, 0
          %s154 = smul.addr %s151, 4
          %s155 = sadd.s32 %s153, %s154
          %s156 = smul.addr %s155, 8
          %s157 = scalar_lea.vmem %s0, %s156
        $region28: #{tpu_custom_call.1} parent=23 // pred_fallthru
          _
      $region24: #{tpu_custom_call.1} parent=5 // pred_fallthru
        _
      %p158 = scmp.le.s32.totalorder 1, %s12
      %p159 = scmp.lt.s32.totalorder %s12, 3
      %p160 = pnand %p158, %p159
      %p161 = pneg %p160
      // Predicated region
      $region29: #{tpu_custom_call.1} parent=5 // pred_check
        _
      $region30: #{tpu_custom_call.1} parent=5 // pred_check_branch
        %163 = sbr.rel (%p160) target = $region32
      $region31: #{tpu_custom_call.1} parent=5 // pred_region
        %s164 = ssub.s32 %s12, 1
        %p165 = scmp.lt.s32.totalorder %s21, 1
        %s166 = scalar_select %p165, %s21, 1
        %p167 = scmp.lt.s32.totalorder %s22, 0
        %s168 = scalar_select %p167, %s22, 0
        %s169 = smul.addr %s166, 4
        %s170 = sadd.s32 %s168, %s169
        %s171 = smul.addr %s170, 8
        %s172 = scalar_lea.vmem %s0, %s171
        %p173 = pneg %p52
        %p174 = pneg %p49
        %p175 = pneg %p73
        %p176 = pneg %p70
        %p177 = pneg %p94
        %p178 = pneg %p91
        %p179 = pneg %p122
        %p180 = pneg %p119
        %s181 = sand.u32 %s109, 1
        %s182 = scalar_lea.sflag [#allocation3], %s181
        %s183 = sand.u32 %s109, 1
        %s184 = smul.addr %s183, 16
        %s185 = scalar_lea.vmem [#allocation2], %s184
        %p186 = scmp.lt.s32.totalorder %s21, 1
        %s187 = scalar_select %p186, %s21, 1
        %p188 = scmp.lt.s32.totalorder %s22, 0
        %s189 = scalar_select %p188, %s22, 0
        %s190 = smul.addr %s187, 4
        %s191 = sadd.s32 %s189, %s190
        %s192 = smul.addr %s191, 8
        %s193 = scalar_lea.vmem %s0, %s192
        %s194 = smul.u32 2, %s22
        %v195 = vld [vmem:[%s1] sm:$0xff]
        %v196 = vld [vmem:[%s1 + $0x8] sm:$0xff]
        %v197 = vld [vmem:[%s1 + $0x10] sm:$0xff]
        %v198 = vld [vmem:[%s1 + $0x18] sm:$0xff]
        %v199 = vld [vmem:[%s2] sm:$0x1]
        %v200 = vld [vmem:[%s193] sm:$0xff]
        %v201 = vld [vmem:[%s193 + $0x8] sm:$0xff]
        %v202 = vld [vmem:[%s193 + $0x10] sm:$0xff]
        %v203 = vld [vmem:[%s193 + $0x18] sm:$0xff]
        %vm204 = vcmask 261120
        %v206 = vsel %vm204, %v195, 0
        %v209 = vsel %vm204, %v196, 0
        %v212 = vsel %vm204, %v197, 0
        %v215 = vsel %vm204, %v198, 0
        %217 = vmatprep.subr.mxu0 0.0
        %218 = vmatpush1.msra.mxu0 %v200
        %219 = vmatprep.subr.mxu0 0.0
        %220 = vmatpush1.msra.mxu0 %v201
        %221 = vmatprep.subr.mxu0 0.0
        %222 = vmatpush1.msra.mxu0 %v202
        %223 = vmatprep.subr.mxu0 0.0
        %224 = vmatpush1.msra.mxu0 %v203
        %225 = vmatprep.subr.mxu0 0.0
        %226 = vmatpush1.msra.mxu0 0.0
        %227 = vmatprep.subr.mxu0 0.0
        %228 = vmatpush1.msra.mxu0 0.0
        %229 = vmatprep.subr.mxu0 0.0
        %230 = vmatpush1.msra.mxu0 0.0
        %231 = vmatprep.subr.mxu0 0.0
        %232 = vmatpush1.msra.mxu0 0.0
        %233 = vmatprep.subr.mxu0 0.0
        %234 = vmatpush1.msra.mxu0 0.0
        %235 = vmatprep.subr.mxu0 0.0
        %236 = vmatpush1.msra.mxu0 0.0
        %237 = vmatprep.subr.mxu0 0.0
        %238 = vmatpush1.msra.mxu0 0.0
        %239 = vmatprep.subr.mxu0 0.0
        %240 = vmatpush1.msra.mxu0 0.0
        %241 = vmatprep.subr.mxu0 0.0
        %242 = vmatpush1.msra.mxu0 0.0
        %243 = vmatprep.subr.mxu0 0.0
        %244 = vmatpush1.msra.mxu0 0.0
        %245 = vmatprep.subr.mxu0 0.0
        %246 = vmatpush1.msra.mxu0 0.0
        %247 = vmatprep.subr.mxu0 0.0
        %248 = vmatpush1.msra.mxu0 0.0
        %249 = vmatprep.subr.mxu0 0.0
        %250 = vmatpush1.msra.mxu0 0.0
        %251 = vmatprep.subr.mxu0 0.0
        %252 = vmatpush1.msra.mxu0 0.0
        %253 = vmatprep.subr.mxu0 0.0
        %254 = vmatpush1.msra.mxu0 0.0
        %255 = vmatprep.subr.mxu0 0.0
        %256 = vmatpush1.msra.mxu0 0.0
        %257 = vmatprep.subr.mxu0 0.0
        %258 = vmatpush1.msra.mxu0 0.0
        %259 = vmatprep.subr.mxu0 0.0
        %260 = vmatpush1.msra.mxu0 0.0
        %261 = vmatprep.subr.mxu0 0.0
        %262 = vmatpush1.msra.mxu0 0.0
        %263 = vmatprep.subr.mxu0 0.0
        %264 = vmatpush1.msra.mxu0 0.0
        %265 = vmatprep.subr.mxu0 0.0
        %266 = vmatpush1.msra.mxu0 0.0
        %267 = vmatprep.subr.mxu0 0.0
        %268 = vmatpush1.msra.mxu0 0.0
        %269 = vmatprep.subr.mxu0 0.0
        %270 = vmatpush1.msra.mxu0 0.0
        %271 = vmatprep.subr.mxu0 0.0
        %272 = vmatpush1.msra.mxu0 0.0
        %273 = vmatprep.subr.mxu0 0.0
        %274 = vmatpush1.msra.mxu0 0.0
        %275 = vmatprep.subr.mxu0 0.0
        %276 = vmatpush1.msra.mxu0 0.0
        %277 = vmatprep.subr.mxu0 0.0
        %278 = vmatpush1.msra.mxu0 0.0
        %279 = vmatprep.subr.mxu0 0.0
        %280 = vmatpush1.msra.mxu0 0.0
        %281 = vmatprep.mubr.f32.mxu0 0.0
        %282 = vmatmul.mubr.f32.gmra.mrb[0].mxu0 %v206
        %v283 = vpop.f32.mrb[0].mxu0
        %v284 = vadd.f32 0.0, %v283
        %v285 = vpop.f32.mrb[0].mxu0
        %286 = vmatprep.mubr.f32.mxu0 0.0
        %287 = vmatmul.mubr.f32.gmra.mrb[0].mxu0 %v209
        %v288 = vpop.f32.mrb[0].mxu0
        %v289 = vadd.f32 0.0, %v288
        %v290 = vpop.f32.mrb[0].mxu0
        %291 = vmatprep.mubr.f32.mxu0 0.0
        %292 = vmatmul.mubr.f32.gmra.mrb[0].mxu0 %v212
        %v293 = vpop.f32.mrb[0].mxu0
        %v294 = vadd.f32 0.0, %v293
        %v295 = vpop.f32.mrb[0].mxu0
        %296 = vmatprep.mubr.f32.mxu0 0.0
        %297 = vmatmul.mubr.f32.gmra.mrb[0].mxu0 %v215
        %v298 = vpop.f32.mrb[0].mxu0
        %v299 = vadd.f32 0.0, %v298
        %v300 = vpop.f32.mrb[0].mxu0
        %301 = vdwg.mxu0
        %302 = vxpose.xlu0.b32.start [1/16] %v284, 128
        %303 = vxpose.xlu0.b32.cont [2/16] %v289, 128
        %304 = vxpose.xlu0.b32.cont [3/16] %v294, 128
        %305 = vxpose.xlu0.b32.cont [4/16] %v299, 128
        %306 = vxpose.xlu0.b32.cont [5/16] 0.0, 128
        %307 = vxpose.xlu0.b32.cont [6/16] 0.0, 128
        %308 = vxpose.xlu0.b32.cont [7/16] 0.0, 128
        %309 = vxpose.xlu0.b32.cont [8/16] 0.0, 128
        %310 = vxpose.xlu0.b32.cont [9/16] 0.0, 128
        %311 = vxpose.xlu0.b32.cont [10/16] 0.0, 128
        %312 = vxpose.xlu0.b32.cont [11/16] 0.0, 128
        %313 = vxpose.xlu0.b32.cont [12/16] 0.0, 128
        %314 = vxpose.xlu0.b32.cont [13/16] 0.0, 128
        %315 = vxpose.xlu0.b32.cont [14/16] 0.0, 128
        %316 = vxpose.xlu0.b32.cont [15/16] 0.0, 128
        %317 = vxpose.xlu0.b32.end [16/16] 0.0, 128
        %v318 = vpop.trf.xlu0
        %v319 = vpop.trf.xlu0
        %v320 = vpop.trf.xlu0
        %v321 = vpop.trf.xlu0
        %v322 = vpop.trf.xlu0
        %v323 = vpop.trf.xlu0
        %v324 = vpop.trf.xlu0
        %v325 = vpop.trf.xlu0
        %v326 = vpop.trf.xlu0
        %v327 = vpop.trf.xlu0
        %v328 = vpop.trf.xlu0
        %v329 = vpop.trf.xlu0
        %v330 = vpop.trf.xlu0
        %v331 = vpop.trf.xlu0
        %v332 = vpop.trf.xlu0
        %v333 = vpop.trf.xlu0
        %v335 = vlaneseq
        %v336 = vshrl.u32 %v335, 7
        %v337 = vsub.s32 0, %v336
        %v338 = vrot.slane %v199, %v337
        %v340 = vadd.f32 %v318, %v338
        %v341 = vadd.f32 %v319, %v338
        %342 = vst.msk [vmem:[%s185] sm:$0xff] %vm204, %v340
        %343 = vst.msk [vmem:[%s185 + $0x8] sm:$0xff] %vm204, %v341
        %s344 = sand.u32 %s109, 1
        %s345 = scalar_lea.sflag [#allocation3], %s344
        %s346 = sand.u32 %s109, 1
        %s347 = smul.addr %s346, 16
        %s348 = scalar_lea.vmem [#allocation2], %s347
        // Predicated region
        $region33: #{tpu_custom_call.1} parent=31 // pred_check
          %p349 = pneg %p119
        $region34: #{tpu_custom_call.1} parent=31 // pred_check_branch
          %351 = sbr.rel (%p349) target = $region36
        $region35: #{tpu_custom_call.1} parent=31 // pred_region
          %s352 = smul.u32 2, %s22
          %s354 = ssub.s32 256, 256
          %355 = vsyncadd %s345, %s354
          %s356 = smul.addr %s21, 2
          %s357 = sadd.s32 %s352, %s356
          %s358 = smul.addr %s357, 128
          %s359 = scalar_lea.hbm %s3, %s358
          %s360 = sshll.u32 %s348, 4
          %s361 = int_to_ptr.vmem [resolvable:$true] %s360
          %366 = dma.vmem_to_hbm [thread:$0]  %s361, 256, %s359, %s345, 128, 128, 8
        $region36: #{tpu_custom_call.1} parent=31 // pred_fallthru
          _
      $region32: #{tpu_custom_call.1} parent=5 // pred_fallthru
        _
      %p367 = scmp.le.s32.totalorder 2, %s12
      // Predicated region
      $region37: #{tpu_custom_call.1} parent=5 // pred_check
        %p368 = pneg %p367
      $region38: #{tpu_custom_call.1} parent=5 // pred_check_branch
        %370 = sbr.rel (%p368) target = $region40
      $region39: #{tpu_custom_call.1} parent=5 // pred_region
        %s371 = ssub.s32 %s12, 2
        // Predicated region
        $region41: #{tpu_custom_call.1} parent=39 // pred_check
          %p372 = pneg %p125
        $region42: #{tpu_custom_call.1} parent=39 // pred_check_branch
          %374 = sbr.rel (%p372) target = $region44
        $region43: #{tpu_custom_call.1} parent=39 // pred_region
          %s375 = sand.u32 %s110, 1
          %s376 = scalar_lea.sflag [#allocation3], %s375
          %s377 = sand.u32 %s110, 1
          %s378 = smul.addr %s377, 16
          %s379 = scalar_lea.vmem [#allocation2], %s378
          %380 = dma.done %s376, 256
        $region44: #{tpu_custom_call.1} parent=39 // pred_fallthru
          _
      $region40: #{tpu_custom_call.1} parent=5 // pred_fallthru
        _
    $region6: #{tpu_custom_call.1} parent=1 // loop_footer
      %s16 = sadd.s32 1, %s12
    $region7: #{tpu_custom_call.1} parent=1 // loop_footer_branch
      %11 = sbr.rel target = $region3
    $region8: #{tpu_custom_call.1} parent=1 // loop_exit
      _
    %381 = vsyncpa [#allocation3], 1
    %s382 = scalar_lea.sflag [#allocation3], 1
    %383 = vsyncpa %s382, 1

</llo_original>
